<compile_context>
chip_gen: v6e
topology: v6e:2x2x1
jax: 0.10.0
libtpu: 0.0.40
codegen_flags: <defaults>
</compile_context>

<pallas_src>
import jax
import jax.numpy as jnp
from jax.experimental import pallas as pl
from jax.experimental.pallas import tpu as pltpu


def _policy_kernel(xT_ref, w1T_ref, b1_ref, w2T_ref, b2_ref, maskT_ref, outT_ref):
    # Feature-major blocks:
    #   xT: (D, TB)  w1T: (H, D)  b1: (H, 1)  w2T: (A, H)  b2: (A, 1)
    #   maskT: (A, TB) int8       outT: (A, TB) f32
    xT = xT_ref[...]
    w1T = w1T_ref[...]
    n_dims = xT.shape[0]  # static Python int

    # --- Linear 1 on the VPU: K = n_dimensions is tiny, so do D broadcast
    # multiply-adds (rank-1 updates) instead of an MXU pass. Bias seeds the
    # accumulator and broadcasts across lanes on the first add.
    h = b1_ref[...]                                   # (H, 1)
    for d in range(n_dims):                           # static trip count
        h = h + w1T[:, d:d + 1] * xT[d:d + 1, :]      # (H,1)*(1,TB) -> (H,TB)

    # --- Exact (erf-based) GELU, matching torch.nn.GELU() default.
    h = 0.5 * h * (1.0 + jax.lax.erf(h * jnp.float32(0.7071067811865476)))

    # --- Linear 2 on the MXU (K = hidden_dim), f32 accumulate, bias fused.
    logits = (
        jnp.dot(w2T_ref[...], h, preferred_element_type=jnp.float32) + b2_ref[...]
    )                                                 # (A, TB)

    # --- masked_fill(~mask, -inf)
    logits = jnp.where(maskT_ref[...] != 0, logits, -jnp.inf)

    # --- log_softmax over the action axis (sublane axis, size A).
    m = jnp.max(logits, axis=0, keepdims=True)        # (1, TB)   cross-sublane (XLU)
    shifted = logits - m
    lse = jnp.log(jnp.sum(jnp.exp(shifted), axis=0, keepdims=True))
    outT_ref[...] = shifted - lse                     # f32, lane-dense unmasked store


def _round_up(x: int, m: int) -> int:
    return ((x + m - 1) // m) * m


def forward_hypergrid_policy(coords, mask, w1, b1, w2, b2, *, batch_tile=2048):
    """coords: (B, D) float, mask: (B, A) bool/int -> (B, A) float32 log-probs.

    Weights stored as (in_features, out_features):
      w1: (D, H), b1: (H,), w2: (H, A), b2: (A,)
    """
    B, D = coords.shape
    H = w1.shape[1]
    A = w2.shape[1]

    # Batch tile: multiple of 128 lanes, no larger than the (rounded-up) batch.
    tb = _round_up(min(batch_tile, _round_up(B, 128)), 128)
    n_blocks = (B + tb - 1) // tb
    b_pad = n_blocks * tb
    pad = b_pad - B

    # Feature-major (lane-dense over batch) layouts — wrapper-side plumbing only.
    # Padded batch columns get an all-allowed mask so they stay finite (they
    # are sliced off afterwards).
    xT = jnp.pad(coords.astype(jnp.float32).T, ((0, 0), (0, pad)))          # (D, B_pad)
    maskT = jnp.pad(mask.astype(jnp.int8).T, ((0, 0), (0, pad)),
                    constant_values=1)                                      # (A, B_pad)

    w1T = w1.T.astype(jnp.float32)                    # (H, D)
    b1c = b1.reshape(H, 1).astype(jnp.float32)        # (H, 1)
    w2T = w2.T.astype(jnp.float32)                    # (A, H)
    b2c = b2.reshape(A, 1).astype(jnp.float32)        # (A, 1)

    outT = pl.pallas_call(
        _policy_kernel,
        out_shape=jax.ShapeDtypeStruct((A, b_pad), jnp.float32),
        grid_spec=pltpu.PrefetchScalarGridSpec(
            num_scalar_prefetch=0,
            grid=(n_blocks,),
            in_specs=[
                pl.BlockSpec((D, tb), lambda i: (0, i)),   # coords block (streamed)
                pl.BlockSpec((H, D), lambda i: (0, 0)),    # w1^T (resident)
                pl.BlockSpec((H, 1), lambda i: (0, 0)),    # b1   (resident)
                pl.BlockSpec((A, H), lambda i: (0, 0)),    # w2^T (resident)
                pl.BlockSpec((A, 1), lambda i: (0, 0)),    # b2   (resident)
                pl.BlockSpec((A, tb), lambda i: (0, i)),   # mask block (streamed)
            ],
            out_specs=pl.BlockSpec((A, tb), lambda i: (0, i)),
        ),
        compiler_params=pltpu.CompilerParams(
            dimension_semantics=("parallel",),  # state rows independent
        ),
    )(xT, w1T, b1c, w2T, b2c, maskT)

    # Back to the module's (n_states, num_actions) layout (plumbing only).
    return outT[:, :B].T


def _torch_linear_init(key, fan_in, fan_out):
    """Deterministic init mimicking nn.Linear's uniform(-1/sqrt(fan_in), ...)."""
    kw, kb = jax.random.split(key)
    bound = 1.0 / jnp.sqrt(jnp.float32(fan_in))
    w = jax.random.uniform(kw, (fan_in, fan_out), jnp.float32, -bound, bound)
    b = jax.random.uniform(kb, (fan_out,), jnp.float32, -bound, bound)
    return w, b


if __name__ == "__main__":
    # Module config: HyperGrid with size=8, n_dimensions=4, hidden_dim=32,
    # num_actions = n_dimensions + 1 (one step per dim + terminate).
    size = 8
    n_dimensions = 4
    hidden_dim = 32
    num_actions = n_dimensions + 1
    n_states = 8

    key = jax.random.PRNGKey(0)
    k_coords, k_mask, k_l1, k_l2 = jax.random.split(key, 4)

    # State encodings (integer grid coords cast to float).
    coords = jax.random.randint(
        k_coords, (n_states, n_dimensions), 0, size
    ).astype(jnp.float32)

    # Possible-actions mask; terminate action always allowed so no row is all-masked.
    mask = jax.random.bernoulli(k_mask, 0.7, (n_states, num_actions))
    mask = mask.at[:, -1].set(True)

    # MLP parameters (deterministic, torch-like init).
    w1, b1 = _torch_linear_init(k_l1, n_dimensions, hidden_dim)
    w2, b2 = _torch_linear_init(k_l2, hidden_dim, num_actions)

    log_probs = forward_hypergrid_policy(coords, mask, w1, b1, w2, b2)
    log_probs = jax.block_until_ready(log_probs)

    # Sanity check against a pure-JAX reference of the torch module's forward.
    h_ref = coords @ w1 + b1
    h_ref = 0.5 * h_ref * (1.0 + jax.lax.erf(h_ref / jnp.sqrt(2.0)))
    logits_ref = h_ref @ w2 + b2
    logits_ref = jnp.where(mask, logits_ref, -jnp.inf)
    ref = jax.nn.log_softmax(logits_ref, axis=1)

    valid = mask
    assert jnp.allclose(
        jnp.where(valid, log_probs, 0.0), jnp.where(valid, ref, 0.0), atol=1e-5
    ), "mismatch vs reference"
    assert bool(jnp.all(jnp.where(valid, True, log_probs == -jnp.inf)))

    print("KERNEL_OK")
</pallas_src>

<mosaic_0001>
module attributes {stable_mosaic.version = 11 : i64} {
  func.func @_policy_kernel(%arg0: i32, %arg1: memref<4x128xf32, #tpu.memory_space<vmem>>, %arg2: memref<32x4xf32, #tpu.memory_space<vmem>>, %arg3: memref<32x1xf32, #tpu.memory_space<vmem>>, %arg4: memref<5x32xf32, #tpu.memory_space<vmem>>, %arg5: memref<5x1xf32, #tpu.memory_space<vmem>>, %arg6: memref<5x128xi8, #tpu.memory_space<vmem>>, %arg7: memref<5x128xf32, #tpu.memory_space<vmem>>) attributes {dimension_semantics = [#tpu.dimension_semantics<parallel>], iteration_bounds = array<i64: 1>, scalar_prefetch = 0 : i64, scratch_operands = 0 : i64, tpu.core_type = #tpu.core_type<tc>, window_params = [{transform_indices = @transform_0, window_bounds = array<i64: 4, 128>}, {pipeline_mode = #tpu.pipeline_mode<synchronous>, transform_indices = @transform_1, window_bounds = array<i64: 32, 4>}, {pipeline_mode = #tpu.pipeline_mode<synchronous>, transform_indices = @transform_2, window_bounds = array<i64: 32, 1>}, {pipeline_mode = #tpu.pipeline_mode<synchronous>, transform_indices = @transform_3, window_bounds = array<i64: 5, 32>}, {pipeline_mode = #tpu.pipeline_mode<synchronous>, transform_indices = @transform_4, window_bounds = array<i64: 5, 1>}, {transform_indices = @transform_5, window_bounds = array<i64: 5, 128>}, {transform_indices = @transform_6, window_bounds = array<i64: 5, 128>}]} {
    %c0 = arith.constant 0 : index
    %c0_0 = arith.constant 0 : index
    %0 = vector.load %arg1[%c0, %c0_0] : memref<4x128xf32, #tpu.memory_space<vmem>>, vector<4x128xf32>
    %c0_1 = arith.constant 0 : index
    %c0_2 = arith.constant 0 : index
    %1 = vector.load %arg2[%c0_1, %c0_2] : memref<32x4xf32, #tpu.memory_space<vmem>>, vector<32x4xf32>
    %c0_3 = arith.constant 0 : index
    %c0_4 = arith.constant 0 : index
    %2 = vector.load %arg3[%c0_3, %c0_4] : memref<32x1xf32, #tpu.memory_space<vmem>>, vector<32x1xf32>
    %3 = vector.extract_strided_slice %1 {offsets = [0, 0], sizes = [32, 1], strides = [1, 1]} : vector<32x4xf32> to vector<32x1xf32>
    %4 = vector.extract_strided_slice %0 {offsets = [0, 0], sizes = [1, 128], strides = [1, 1]} : vector<4x128xf32> to vector<1x128xf32>
    %5 = vector.broadcast %3 : vector<32x1xf32> to vector<32x128xf32>
    %6 = vector.broadcast %4 : vector<1x128xf32> to vector<32x128xf32>
    %7 = arith.mulf %5, %6 : vector<32x128xf32>
    %8 = vector.broadcast %2 : vector<32x1xf32> to vector<32x128xf32>
    %9 = arith.addf %8, %7 : vector<32x128xf32>
    %10 = vector.extract_strided_slice %1 {offsets = [0, 1], sizes = [32, 1], strides = [1, 1]} : vector<32x4xf32> to vector<32x1xf32>
    %11 = vector.extract_strided_slice %0 {offsets = [1, 0], sizes = [1, 128], strides = [1, 1]} : vector<4x128xf32> to vector<1x128xf32>
    %12 = vector.broadcast %10 : vector<32x1xf32> to vector<32x128xf32>
    %13 = vector.broadcast %11 : vector<1x128xf32> to vector<32x128xf32>
    %14 = arith.mulf %12, %13 : vector<32x128xf32>
    %15 = arith.addf %9, %14 : vector<32x128xf32>
    %16 = vector.extract_strided_slice %1 {offsets = [0, 2], sizes = [32, 1], strides = [1, 1]} : vector<32x4xf32> to vector<32x1xf32>
    %17 = vector.extract_strided_slice %0 {offsets = [2, 0], sizes = [1, 128], strides = [1, 1]} : vector<4x128xf32> to vector<1x128xf32>
    %18 = vector.broadcast %16 : vector<32x1xf32> to vector<32x128xf32>
    %19 = vector.broadcast %17 : vector<1x128xf32> to vector<32x128xf32>
    %20 = arith.mulf %18, %19 : vector<32x128xf32>
    %21 = arith.addf %15, %20 : vector<32x128xf32>
    %22 = vector.extract_strided_slice %1 {offsets = [0, 3], sizes = [32, 1], strides = [1, 1]} : vector<32x4xf32> to vector<32x1xf32>
    %23 = vector.extract_strided_slice %0 {offsets = [3, 0], sizes = [1, 128], strides = [1, 1]} : vector<4x128xf32> to vector<1x128xf32>
    %24 = vector.broadcast %22 : vector<32x1xf32> to vector<32x128xf32>
    %25 = vector.broadcast %23 : vector<1x128xf32> to vector<32x128xf32>
    %26 = arith.mulf %24, %25 : vector<32x128xf32>
    %27 = arith.addf %21, %26 : vector<32x128xf32>
    %cst = arith.constant 5.000000e-01 : f32
    %28 = vector.broadcast %cst : f32 to vector<32x128xf32>
    %29 = arith.mulf %28, %27 : vector<32x128xf32>
    %cst_5 = arith.constant 0.707106769 : f32
    %30 = vector.broadcast %cst_5 : f32 to vector<32x128xf32>
    %31 = arith.mulf %27, %30 : vector<32x128xf32>
    %32 = math.erf %31 : vector<32x128xf32>
    %cst_6 = arith.constant 1.000000e+00 : f32
    %33 = vector.broadcast %cst_6 : f32 to vector<32x128xf32>
    %34 = arith.addf %33, %32 : vector<32x128xf32>
    %35 = arith.mulf %29, %34 : vector<32x128xf32>
    %c0_7 = arith.constant 0 : index
    %c0_8 = arith.constant 0 : index
    %36 = vector.load %arg4[%c0_7, %c0_8] : memref<5x32xf32, #tpu.memory_space<vmem>>, vector<5x32xf32>
    %cst_9 = arith.constant dense<0.000000e+00> : vector<5x128xf32>
    %37 = tpu.matmul %36, %35, %cst_9 {dimension_numbers = #tpu.dot_dimension_numbers<[1], [0], [0], [1], [0, 0, 1, 1], [], []>} : vector<5x32xf32>, vector<32x128xf32>, vector<5x128xf32> -> vector<5x128xf32>
    %c0_10 = arith.constant 0 : index
    %c0_11 = arith.constant 0 : index
    %38 = vector.load %arg5[%c0_10, %c0_11] : memref<5x1xf32, #tpu.memory_space<vmem>>, vector<5x1xf32>
    %39 = vector.broadcast %38 : vector<5x1xf32> to vector<5x128xf32>
    %40 = arith.addf %37, %39 : vector<5x128xf32>
    %c0_12 = arith.constant 0 : index
    %c0_13 = arith.constant 0 : index
    %41 = vector.load %arg6[%c0_12, %c0_13] : memref<5x128xi8, #tpu.memory_space<vmem>>, vector<5x128xi8>
    %c0_i8 = arith.constant 0 : i8
    %42 = vector.broadcast %c0_i8 : i8 to vector<5x128xi8>
    %43 = arith.cmpi ne, %41, %42 : vector<5x128xi8>
    %cst_14 = arith.constant 0xFF800000 : f32
    %44 = vector.broadcast %cst_14 : f32 to vector<5x128xf32>
    %45 = arith.select %43, %40, %44 : vector<5x128xi1>, vector<5x128xf32>
    %cst_15 = arith.constant dense<0xFF800000> : vector<128xf32>
    %46 = vector.multi_reduction <maximumf>, %45, %cst_15 [0] : vector<5x128xf32> to vector<128xf32>
    %47 = vector.shape_cast %46 : vector<128xf32> to vector<1x128xf32>
    %48 = vector.broadcast %47 : vector<1x128xf32> to vector<5x128xf32>
    %49 = arith.subf %45, %48 : vector<5x128xf32>
    %50 = math.exp %49 : vector<5x128xf32>
    %cst_16 = arith.constant dense<0.000000e+00> : vector<128xf32>
    %51 = vector.multi_reduction <add>, %50, %cst_16 [0] : vector<5x128xf32> to vector<128xf32>
    %52 = vector.shape_cast %51 : vector<128xf32> to vector<1x128xf32>
    %53 = math.log %52 : vector<1x128xf32>
    %54 = vector.broadcast %53 : vector<1x128xf32> to vector<5x128xf32>
    %55 = arith.subf %49, %54 : vector<5x128xf32>
    %c0_17 = arith.constant 0 : index
    %c0_18 = arith.constant 0 : index
    %56 = vector.load %arg7[%c0_17, %c0_18] : memref<5x128xf32, #tpu.memory_space<vmem>>, vector<5x128xf32>
    tpu.vector_store %arg7[%c0_17, %c0_18], %55 {strides = array<i32>} : memref<5x128xf32, #tpu.memory_space<vmem>>, vector<5x128xf32>,
    return
  }
  func.func @transform_0(%arg0: i32) -> (i32, i32) {
    %c0_i32 = arith.constant 0 : i32
    %c0_i32_0 = arith.constant 0 : i32
    return %c0_i32, %arg0 : i32, i32
  }
  func.func @transform_1(%arg0: i32) -> (i32, i32) {
    %c0_i32 = arith.constant 0 : i32
    %c0_i32_0 = arith.constant 0 : i32
    %c0_i32_1 = arith.constant 0 : i32
    return %c0_i32, %c0_i32_0 : i32, i32
  }
  func.func @transform_2(%arg0: i32) -> (i32, i32) {
    %c0_i32 = arith.constant 0 : i32
    %c0_i32_0 = arith.constant 0 : i32
    %c0_i32_1 = arith.constant 0 : i32
    return %c0_i32, %c0_i32_0 : i32, i32
  }
  func.func @transform_3(%arg0: i32) -> (i32, i32) {
    %c0_i32 = arith.constant 0 : i32
    %c0_i32_0 = arith.constant 0 : i32
    %c0_i32_1 = arith.constant 0 : i32
    return %c0_i32, %c0_i32_0 : i32, i32
  }
  func.func @transform_4(%arg0: i32) -> (i32, i32) {
    %c0_i32 = arith.constant 0 : i32
    %c0_i32_0 = arith.constant 0 : i32
    %c0_i32_1 = arith.constant 0 : i32
    return %c0_i32, %c0_i32_0 : i32, i32
  }
  func.func @transform_5(%arg0: i32) -> (i32, i32) {
    %c0_i32 = arith.constant 0 : i32
    %c0_i32_0 = arith.constant 0 : i32
    return %c0_i32, %arg0 : i32, i32
  }
  func.func @transform_6(%arg0: i32) -> (i32, i32) {
    %c0_i32 = arith.constant 0 : i32
    %c0_i32_0 = arith.constant 0 : i32
    return %c0_i32, %arg0 : i32, i32
  }
}

</mosaic_0001>

<llo_original>
// kernel: tpu_custom_call.1
$region0: #{tpu_custom_call.1}
  #allocation0 [shape = 'u32[]', space=smem, size = 0x4, offset = 0x4, fixed_abs, tag = 'smem constant byte address 0x4 - core index']
  #allocation1 [shape = 'u32[144,128]{1,0:T(1,128)}', space=vmem, size = 0x12000, scoped, tag = 'internal scratch']
  %s0 = inlined_call_operand.vmem [shape: f32[4,128], index: 0, kind: input, shape index: {}]
  %s1 = inlined_call_operand.vmem [shape: f32[32,4], index: 1, kind: input, shape index: {}]
  %s2 = inlined_call_operand.vmem [shape: f32[32,1], index: 2, kind: input, shape index: {}]
  %s3 = inlined_call_operand.vmem [shape: f32[5,32], index: 3, kind: input, shape index: {}]
  %s4 = inlined_call_operand.vmem [shape: f32[5,1], index: 4, kind: input, shape index: {}]
  %s5 = inlined_call_operand.vmem [shape: s8[5,128], index: 5, kind: input, shape index: {}]
  %s6 = inlined_call_operand.hbm [shape: f32[5,128], index: 6, kind: output, shape index: {}]
  %s7 = sld [smem:[#allocation0]]
  $region34: #{tpu_custom_call.1} parent=0
    _
  %s9 = ssub.s32 1, %s7
  %s10 = scalar_select 0, %s9, %s7
  $region1: #{tpu_custom_call.1} parent=0
    #allocation2 [shape = 'u8[4096]{0}', space=vmem, size = 0x1000, scoped, tag = 'output window, operand 0, single buffered']
    #allocation3 [shape = 's32[1]{0}', space=sflag, size = 0x4, scoped, tag = 'scoped memory for tpu_custom_call.1']
    %11 = vsyncpa [#allocation3], 0
    // Predicated region
    $region2: #{tpu_custom_call.1} parent=1 // pred_check
      _
    $region3: #{tpu_custom_call.1} parent=1 // pred_check_branch
      %13 = sbr.rel (0) target = $region5
    $region4: #{tpu_custom_call.1} parent=1 // pred_region
      _
    $region5: #{tpu_custom_call.1} parent=1 // pred_fallthru
      _
    // Predicated region
    $region6: #{tpu_custom_call.1} parent=1 // pred_check
      _
    $region7: #{tpu_custom_call.1} parent=1 // pred_check_branch
      %15 = sbr.rel (0) target = $region9
    $region8: #{tpu_custom_call.1} parent=1 // pred_region
      _
    $region9: #{tpu_custom_call.1} parent=1 // pred_fallthru
      _
    // Predicated region
    $region10: #{tpu_custom_call.1} parent=1 // pred_check
      _
    $region11: #{tpu_custom_call.1} parent=1 // pred_check_branch
      %17 = sbr.rel (0) target = $region13
    $region12: #{tpu_custom_call.1} parent=1 // pred_region
      _
    $region13: #{tpu_custom_call.1} parent=1 // pred_fallthru
      _
    // Predicated region
    $region14: #{tpu_custom_call.1} parent=1 // pred_check
      _
    $region15: #{tpu_custom_call.1} parent=1 // pred_check_branch
      %19 = sbr.rel (0) target = $region17
    $region16: #{tpu_custom_call.1} parent=1 // pred_region
      _
    $region17: #{tpu_custom_call.1} parent=1 // pred_fallthru
      _
    // Predicated region
    $region18: #{tpu_custom_call.1} parent=1 // pred_check
      _
    $region19: #{tpu_custom_call.1} parent=1 // pred_check_branch
      %21 = sbr.rel (0) target = $region21
    $region20: #{tpu_custom_call.1} parent=1 // pred_region
      _
    $region21: #{tpu_custom_call.1} parent=1 // pred_fallthru
      _
    // Predicated region
    $region22: #{tpu_custom_call.1} parent=1 // pred_check
      _
    $region23: #{tpu_custom_call.1} parent=1 // pred_check_branch
      %23 = sbr.rel (0) target = $region25
    $region24: #{tpu_custom_call.1} parent=1 // pred_region
      _
    $region25: #{tpu_custom_call.1} parent=1 // pred_fallthru
      _
    %v26 = vld [vmem:[%s0] sm:$0xf]
    %v27 = vld [vmem:[%s1] sm:$0xff]
    %v28 = vld [vmem:[%s1 + $0x8] sm:$0xff]
    %v29 = vld [vmem:[%s1 + $0x10] sm:$0xff]
    %v30 = vld [vmem:[%s1 + $0x18] sm:$0xff]
    %v31 = vld [vmem:[%s2] sm:$0xff]
    %v32 = vld [vmem:[%s2 + $0x8] sm:$0xff]
    %v33 = vld [vmem:[%s2 + $0x10] sm:$0xff]
    %v34 = vld [vmem:[%s2 + $0x18] sm:$0xff]
    %36 = vset.pattern.permute.xlu0 0
    %37 = vperm.xlu0 %36, %v27
    %v38 = vpop.permute.xlu0 %37
    %41 = vset.pattern.permute.xlu0 0
    %42 = vperm.xlu0 %41, %v28
    %v43 = vpop.permute.xlu0 %42
    %46 = vset.pattern.permute.xlu0 0
    %47 = vperm.xlu0 %46, %v29
    %v48 = vpop.permute.xlu0 %47
    %51 = vset.pattern.permute.xlu0 0
    %52 = vperm.xlu0 %51, %v30
    %v53 = vpop.permute.xlu0 %52
    %v55 = vlaneseq
    %v56 = vshrl.u32 %v55, 7
    %v57 = vsub.s32 0, %v56
    %v58 = vrot.slane %v26, %v57
    %v59 = vmul.f32 %v38, %v58
    %v60 = vmul.f32 %v43, %v58
    %v61 = vmul.f32 %v48, %v58
    %v62 = vmul.f32 %v53, %v58
    %64 = vset.pattern.permute.xlu0 0
    %65 = vperm.xlu0 %64, %v31
    %v66 = vpop.permute.xlu0 %65
    %69 = vset.pattern.permute.xlu0 0
    %70 = vperm.xlu0 %69, %v32
    %v71 = vpop.permute.xlu0 %70
    %74 = vset.pattern.permute.xlu0 0
    %75 = vperm.xlu0 %74, %v33
    %v76 = vpop.permute.xlu0 %75
    %79 = vset.pattern.permute.xlu0 0
    %80 = vperm.xlu0 %79, %v34
    %v81 = vpop.permute.xlu0 %80
    %v83 = vadd.f32 %v66, %v59
    %v84 = vadd.f32 %v71, %v60
    %v85 = vadd.f32 %v76, %v61
    %v86 = vadd.f32 %v81, %v62
    %87 = vset.pattern.permute.xlu0 1
    %88 = vperm.xlu0 %87, %v27
    %v89 = vpop.permute.xlu0 %88
    %91 = vset.pattern.permute.xlu0 1
    %92 = vperm.xlu0 %91, %v28
    %v93 = vpop.permute.xlu0 %92
    %95 = vset.pattern.permute.xlu0 1
    %96 = vperm.xlu0 %95, %v29
    %v97 = vpop.permute.xlu0 %96
    %99 = vset.pattern.permute.xlu0 1
    %100 = vperm.xlu0 %99, %v30
    %v101 = vpop.permute.xlu0 %100
    %v103 = vlaneseq
    %v104 = vshrl.u32 %v103, 7
    %v105 = vsub.s32 1, %v104
    %v106 = vrot.slane %v26, %v105
    %v107 = vmul.f32 %v89, %v106
    %v108 = vmul.f32 %v93, %v106
    %v109 = vmul.f32 %v97, %v106
    %v110 = vmul.f32 %v101, %v106
    %v111 = vadd.f32 %v83, %v107
    %v112 = vadd.f32 %v84, %v108
    %v113 = vadd.f32 %v85, %v109
    %v114 = vadd.f32 %v86, %v110
    %115 = vset.pattern.permute.xlu0 2
    %116 = vperm.xlu0 %115, %v27
    %v117 = vpop.permute.xlu0 %116
    %119 = vset.pattern.permute.xlu0 2
    %120 = vperm.xlu0 %119, %v28
    %v121 = vpop.permute.xlu0 %120
    %123 = vset.pattern.permute.xlu0 2
    %124 = vperm.xlu0 %123, %v29
    %v125 = vpop.permute.xlu0 %124
    %127 = vset.pattern.permute.xlu0 2
    %128 = vperm.xlu0 %127, %v30
    %v129 = vpop.permute.xlu0 %128
    %v131 = vlaneseq
    %v132 = vshrl.u32 %v131, 7
    %v133 = vsub.s32 2, %v132
    %v134 = vrot.slane %v26, %v133
    %v135 = vmul.f32 %v117, %v134
    %v136 = vmul.f32 %v121, %v134
    %v137 = vmul.f32 %v125, %v134
    %v138 = vmul.f32 %v129, %v134
    %v139 = vadd.f32 %v111, %v135
    %v140 = vadd.f32 %v112, %v136
    %v141 = vadd.f32 %v113, %v137
    %v142 = vadd.f32 %v114, %v138
    %143 = vset.pattern.permute.xlu0 3
    %144 = vperm.xlu0 %143, %v27
    %v145 = vpop.permute.xlu0 %144
    %147 = vset.pattern.permute.xlu0 3
    %148 = vperm.xlu0 %147, %v28
    %v149 = vpop.permute.xlu0 %148
    %151 = vset.pattern.permute.xlu0 3
    %152 = vperm.xlu0 %151, %v29
    %v153 = vpop.permute.xlu0 %152
    %155 = vset.pattern.permute.xlu0 3
    %156 = vperm.xlu0 %155, %v30
    %v157 = vpop.permute.xlu0 %156
    %v159 = vlaneseq
    %v160 = vshrl.u32 %v159, 7
    %v161 = vsub.s32 3, %v160
    %v162 = vrot.slane %v26, %v161
    %v163 = vmul.f32 %v145, %v162
    %v164 = vmul.f32 %v149, %v162
    %v165 = vmul.f32 %v153, %v162
    %v166 = vmul.f32 %v157, %v162
    %v167 = vadd.f32 %v139, %v163
    %v168 = vadd.f32 %v140, %v164
    %v169 = vadd.f32 %v141, %v165
    %v170 = vadd.f32 %v142, %v166
    %v171 = vmul.f32 %v167, 0.5
    %v172 = vmul.f32 %v168, 0.5
    %v173 = vmul.f32 %v169, 0.5
    %v174 = vmul.f32 %v170, 0.5
    %v175 = vmul.f32 %v167, 0.70710677
    %v176 = vmul.f32 %v168, 0.70710677
    %v177 = vmul.f32 %v169, 0.70710677
    %v178 = vmul.f32 %v170, 0.70710677
    %v179 = verf.f32.pop %v175
    %v180 = verf.f32.pop %v176
    %v181 = verf.f32.pop %v177
    %v182 = verf.f32.pop %v178
    %v183 = vadd.f32 %v179, 1.0
    %v184 = vadd.f32 %v180, 1.0
    %v185 = vadd.f32 %v181, 1.0
    %v186 = vadd.f32 %v182, 1.0
    %v187 = vmul.f32 %v171, %v183
    %v188 = vmul.f32 %v172, %v184
    %v189 = vmul.f32 %v173, %v185
    %v190 = vmul.f32 %v174, %v186
    %v191 = vld [vmem:[%s3] sm:$0x1f]
    %v192 = vld [vmem:[%s4] sm:$0x1f]
    %194 = vset.pattern.permute.xlu0 0
    %195 = vperm.xlu0 %194, %v192
    %v196 = vpop.permute.xlu0 %195
    %vm198 = vcmask 261120
    %v200 = vsel %vm198, %v191, 0
    %202 = vmatprep.subr.mxu0 0.0
    %203 = vmatpush1.msra.mxu0 0.0
    %204 = vmatprep.subr.mxu0 0.0
    %205 = vmatpush1.msra.mxu0 0.0
    %206 = vmatprep.subr.mxu0 0.0
    %207 = vmatpush1.msra.mxu0 0.0
    %208 = vmatprep.subr.mxu0 0.0
    %209 = vmatpush1.msra.mxu0 0.0
    %210 = vmatprep.subr.mxu0 0.0
    %211 = vmatpush1.msra.mxu0 0.0
    %212 = vmatprep.subr.mxu0 0.0
    %213 = vmatpush1.msra.mxu0 0.0
    %214 = vmatprep.subr.mxu0 0.0
    %215 = vmatpush1.msra.mxu0 0.0
    %216 = vmatprep.subr.mxu0 0.0
    %217 = vmatpush1.msra.mxu0 0.0
    %218 = vmatprep.subr.mxu0 0.0
    %219 = vmatpush1.msra.mxu0 0.0
    %220 = vmatprep.subr.mxu0 0.0
    %221 = vmatpush1.msra.mxu0 0.0
    %222 = vmatprep.subr.mxu0 0.0
    %223 = vmatpush1.msra.mxu0 0.0
    %224 = vmatprep.subr.mxu0 0.0
    %225 = vmatpush1.msra.mxu0 0.0
    %226 = vmatprep.subr.mxu0 0.0
    %227 = vmatpush1.msra.mxu0 %v190
    %228 = vmatprep.subr.mxu0 0.0
    %229 = vmatpush1.msra.mxu0 %v189
    %230 = vmatprep.subr.mxu0 0.0
    %231 = vmatpush1.msra.mxu0 %v188
    %232 = vmatprep.subr.mxu0 0.0
    %233 = vmatpush1.msra.mxu0 %v187
    %234 = vmatprep.subr.mxu0 0.0
    %235 = vmatpush2.msra.mxu0 0.0
    %236 = vmatprep.subr.mxu0 0.0
    %237 = vmatpush2.msra.mxu0 0.0
    %238 = vmatprep.subr.mxu0 0.0
    %239 = vmatpush2.msra.mxu0 0.0
    %240 = vmatprep.subr.mxu0 0.0
    %241 = vmatpush2.msra.mxu0 0.0
    %242 = vmatprep.subr.mxu0 0.0
    %243 = vmatpush2.msra.mxu0 0.0
    %244 = vmatprep.subr.mxu0 0.0
    %245 = vmatpush2.msra.mxu0 0.0
    %246 = vmatprep.subr.mxu0 0.0
    %247 = vmatpush2.msra.mxu0 0.0
    %248 = vmatprep.subr.mxu0 0.0
    %249 = vmatpush2.msra.mxu0 0.0
    %250 = vmatprep.subr.mxu0 0.0
    %251 = vmatpush2.msra.mxu0 0.0
    %252 = vmatprep.subr.mxu0 0.0
    %253 = vmatpush2.msra.mxu0 0.0
    %254 = vmatprep.subr.mxu0 0.0
    %255 = vmatpush2.msra.mxu0 0.0
    %256 = vmatprep.subr.mxu0 0.0
    %257 = vmatpush2.msra.mxu0 0.0
    %258 = vmatprep.subr.mxu0 0.0
    %259 = vmatpush2.msra.mxu0 0.0
    %260 = vmatprep.subr.mxu0 0.0
    %261 = vmatpush2.msra.mxu0 0.0
    %262 = vmatprep.subr.mxu0 0.0
    %263 = vmatpush2.msra.mxu0 0.0
    %264 = vmatprep.subr.mxu0 0.0
    %265 = vmatpush2.msra.mxu0 0.0
    %266 = vmatprep.mubr.f32.mxu0 0.0
    %267 = vmatmul.mubr.f32.gmra.mxu0 %v200
    %v268 = vpop.f32.mrf.mxu0
    %v269 = vadd.f32 %v196, %v268
    %v270 = vpop.f32.mrf.mxu0
    %271 = vdwg.mxu0
    %v272 = vld [vmem:[%s5] sm:$0x3]
    %vm273 = vnez %v272
    %v274 = vsel %vm273, 16843009, 0
    %v275 = vunpack.c.0.s8 %v274
    %vm276 = vcmp.ne.s32.totalorder %v275, 0
    %v277 = vsel %vm276, %v269, -inf
    %vm278 = vcmask 1044480
    %v279 = vsel %vm278, %v277, -inf
    %v280 = vrot.slane %v279, 4
    %v281 = vmax.f32 %v279, %v280
    %v282 = vrot.slane %v281, 2
    %v283 = vmax.f32 %v281, %v282
    %v284 = vrot.slane %v283, 1
    %v285 = vmax.f32 %v283, %v284
    %v286 = vsub.f32 %v277, %v285
    %v287 = vmul.f32 %v286, 1.442695
    %v288 = vpow.pop %v287
    %v289 = vsel %vm278, %v288, 0.0
    %v290 = vrot.slane %v289, 4
    %v291 = vadd.f32 %v289, %v290
    %v292 = vrot.slane %v291, 2
    %v293 = vadd.f32 %v291, %v292
    %v294 = vrot.slane %v293, 1
    %v295 = vadd.f32 %v293, %v294
    %v296 = vlog2.pop %v295
    %v297 = vmul.f32 %v296, 0.6931472
    %v298 = vsub.f32 %v286, %v297
    %299 = vst [vmem:[#allocation2] sm:$0x1f] %v298
    // Predicated region
    $region26: #{tpu_custom_call.1} parent=1 // pred_check
      _
    $region27: #{tpu_custom_call.1} parent=1 // pred_check_branch
      %301 = sbr.rel (0) target = $region29
    $region28: #{tpu_custom_call.1} parent=1 // pred_region
      %s303 = ssub.s32 128, 128
      %304 = vsyncadd [#allocation3], %s303
      %s306 = sshll.u32 [#allocation2], 4
      %s307 = int_to_ptr.vmem [resolvable:$true] %s306
      %309 = dma.vmem_to_hbm [thread:$0]  %s307, 128, %s6, [#allocation3]
    $region29: #{tpu_custom_call.1} parent=1 // pred_fallthru
      _
    // Predicated region
    $region30: #{tpu_custom_call.1} parent=1 // pred_check
      _
    $region31: #{tpu_custom_call.1} parent=1 // pred_check_branch
      %311 = sbr.rel (0) target = $region33
    $region32: #{tpu_custom_call.1} parent=1 // pred_region
      %312 = dma.done [#allocation3], 128
    $region33: #{tpu_custom_call.1} parent=1 // pred_fallthru
      _
    %313 = vsyncpa [#allocation3], 1

</llo_original>
